<compile_context>
chip_gen: v5e
topology: v5e:2x2
jax: 0.10.0
libtpu: 0.0.40
codegen_flags: <defaults>
</compile_context>

<pallas_src>
import jax
import jax.numpy as jnp
from jax.experimental import pallas as pl
from jax.experimental.pallas import tpu as pltpu

PIANO_RANGE = (21, 109)
PIANO_N_KEYS = PIANO_RANGE[1] - PIANO_RANGE[0]   # 88
N_FRAMES_PER_DATAPOINT = 128                     # synthetic small value


def _interpreter_kernel(w_ref, x_ref, o_ref):
    # w_ref: (P, P) pre-softmaxed simplex, resident across all grid steps.
    # x_ref / o_ref: (P, NT) tile of the flattened (P, B*C*T) activation matrix.
    o_ref[...] = jnp.dot(
        w_ref[...], x_ref[...], preferred_element_type=jnp.float32
    ).astype(o_ref.dtype)


def _pick_n_tile(n, max_tile=2048):
    """Largest multiple of 128 dividing n, capped, preferring >= 2 grid steps."""
    cap = min(max_tile, max(n // 2, 128))
    best = 128
    t = 128
    while t <= cap:
        if n % t == 0:
            best = t
        t += 128
    return best


def interpreter_forward(x, w):
    """x: (B, 2, P, T) float32, w: (P, P) float32 raw parameter."""
    B, C, P, T = x.shape
    assert C == 2
    assert P == PIANO_N_KEYS
    assert T == N_FRAMES_PER_DATAPOINT

    # simplex(): softmax over dim=0 (column-wise) — hoisted out of the kernel,
    # computed once per call instead of once per grid step.
    simplex = jax.nn.softmax(w.astype(jnp.float32), axis=0).astype(x.dtype)  # (P, P)

    # Collapse (B, C, T) into one long N axis: x2[p, (b,c,t)] = x[b,c,p,t].
    N = B * C * T
    x_flat = jnp.transpose(x, (2, 0, 1, 3)).reshape(P, N)                    # (P, N)

    nt = _pick_n_tile(N)
    grid = (N // nt,)

    out_flat = pl.pallas_call(
        _interpreter_kernel,
        out_shape=jax.ShapeDtypeStruct((P, N), x.dtype),
        grid=grid,
        in_specs=[
            pl.BlockSpec((P, P), lambda i: (0, 0)),     # simplex kept resident
            pl.BlockSpec((P, nt), lambda i: (0, i)),    # lane-dense N tile
        ],
        out_specs=pl.BlockSpec((P, nt), lambda i: (0, i)),
        compiler_params=pltpu.CompilerParams(
            dimension_semantics=("parallel",),
        ),
    )(simplex, x_flat)

    # (P, N) -> (P, B, C, T) -> (B, C, P, T)
    return jnp.transpose(out_flat.reshape(P, B, C, T), (1, 2, 0, 3))


def _reference_forward(x, w):
    # Pure-JAX reference mirroring the PyTorch forward exactly.
    simplex = jax.nn.softmax(w, axis=0)                        # (P, P)
    xp = jnp.transpose(x, (0, 1, 3, 2))                        # (B,2,T,P)
    y = jnp.einsum("bctp,op->bcto", xp, simplex)               # F.linear
    return jnp.transpose(y, (0, 1, 3, 2))                      # (B,2,P,T)


if __name__ == "__main__":
    key = jax.random.PRNGKey(0)
    k_w, k_x = jax.random.split(key)

    B = 2
    P = PIANO_N_KEYS
    T = N_FRAMES_PER_DATAPOINT

    # Deterministic parameter init: w = randn(P, P)  (init_oracle_w_offset=None,
    # project_w_to_doubly_stochastic=False -> simplex() = softmax(w, dim=0)).
    w = jax.random.normal(k_w, (P, P), dtype=jnp.float32)
    x = jax.random.normal(k_x, (B, 2, P, T), dtype=jnp.float32)

    out = interpreter_forward(x, w)
    out = jax.block_until_ready(out)

    ref = _reference_forward(x, w)
    assert out.shape == (B, 2, P, T)
    assert jnp.allclose(out, ref, atol=1e-4, rtol=1e-4), "mismatch vs reference"

    print("KERNEL_OK")
</pallas_src>

<mosaic_0001>
module attributes {stable_mosaic.version = 11 : i64} {
  func.func @_interpreter_kernel(%arg0: i32, %arg1: memref<88x88xf32, #tpu.memory_space<vmem>>, %arg2: memref<88x256xf32, #tpu.memory_space<vmem>>, %arg3: memref<88x256xf32, #tpu.memory_space<vmem>>) attributes {dimension_semantics = [#tpu.dimension_semantics<parallel>], iteration_bounds = array<i64: 2>, scalar_prefetch = 0 : i64, scratch_operands = 0 : i64, tpu.core_type = #tpu.core_type<tc>, window_params = [{pipeline_mode = #tpu.pipeline_mode<synchronous>, transform_indices = @transform_0, window_bounds = array<i64: 88, 88>}, {transform_indices = @transform_1, window_bounds = array<i64: 88, 256>}, {transform_indices = @transform_2, window_bounds = array<i64: 88, 256>}]} {
    %c0 = arith.constant 0 : index
    %c0_0 = arith.constant 0 : index
    %0 = vector.load %arg1[%c0, %c0_0] : memref<88x88xf32, #tpu.memory_space<vmem>>, vector<88x88xf32>
    %c0_1 = arith.constant 0 : index
    %c0_2 = arith.constant 0 : index
    %1 = vector.load %arg2[%c0_1, %c0_2] : memref<88x256xf32, #tpu.memory_space<vmem>>, vector<88x256xf32>
    %cst = arith.constant dense<0.000000e+00> : vector<88x256xf32>
    %2 = tpu.matmul %0, %1, %cst {dimension_numbers = #tpu.dot_dimension_numbers<[1], [0], [0], [1], [0, 0, 1, 1], [], []>} : vector<88x88xf32>, vector<88x256xf32>, vector<88x256xf32> -> vector<88x256xf32>
    %c0_3 = arith.constant 0 : index
    %c0_4 = arith.constant 0 : index
    %3 = vector.load %arg3[%c0_3, %c0_4] : memref<88x256xf32, #tpu.memory_space<vmem>>, vector<88x256xf32>
    tpu.vector_store %arg3[%c0_3, %c0_4], %2 {strides = array<i32>} : memref<88x256xf32, #tpu.memory_space<vmem>>, vector<88x256xf32>,
    return
  }
  func.func @transform_0(%arg0: i32) -> (i32, i32) {
    %c0_i32 = arith.constant 0 : i32
    %c0_i32_0 = arith.constant 0 : i32
    %c0_i32_1 = arith.constant 0 : i32
    return %c0_i32, %c0_i32_0 : i32, i32
  }
  func.func @transform_1(%arg0: i32) -> (i32, i32) {
    %c0_i32 = arith.constant 0 : i32
    %c0_i32_0 = arith.constant 0 : i32
    return %c0_i32, %arg0 : i32, i32
  }
  func.func @transform_2(%arg0: i32) -> (i32, i32) {
    %c0_i32 = arith.constant 0 : i32
    %c0_i32_0 = arith.constant 0 : i32
    return %c0_i32, %arg0 : i32, i32
  }
}

</mosaic_0001>

<llo_original>
// kernel: tpu_custom_call.1
$region0: #{tpu_custom_call.1}
  #allocation0 [shape = 'u32[]', space=smem, size = 0x4, offset = 0x4, fixed_abs, tag = 'smem constant byte address 0x4 - core index']
  #allocation1 [shape = 'u32[72,128]{1,0:T(1,128)}', space=vmem, size = 0x9000, scoped, tag = 'internal scratch']
  %s0 = inlined_call_operand.hbm [shape: f32[88,88], index: 0, kind: input, shape index: {}]
  %s1 = inlined_call_operand.hbm [shape: f32[88,512], index: 1, kind: input, shape index: {}]
  %s2 = inlined_call_operand.hbm [shape: f32[88,512], index: 2, kind: output, shape index: {}]
  %s3 = sld [smem:[#allocation0]]
  $region49: #{tpu_custom_call.1} parent=0
    _
  %s5 = ssub.s32 1, %s3
  %s6 = scalar_select 0, %s5, %s3
  $region1: #{tpu_custom_call.1} parent=0
    #allocation2 [shape = 'u8[45056]{0}', space=vmem, size = 0xb000, scoped, tag = 'input window, operand 0, single buffered']
    #allocation3 [shape = 's32[2]{0}', space=sflag, size = 0x8, scoped, tag = 'scoped memory for tpu_custom_call.1']
    #allocation4 [shape = 's32[2]{0}', space=sflag, size = 0x8, scoped, tag = 'scoped memory for tpu_custom_call.1']
    #allocation5 [shape = 'u8[180224]{0}', space=vmem, size = 0x2c000, scoped, tag = 'input window, operand 1']
    #allocation6 [shape = 's32[2]{0}', space=sflag, size = 0x8, scoped, tag = 'scoped memory for tpu_custom_call.1']
    #allocation7 [shape = 'u8[180224]{0}', space=vmem, size = 0x2c000, scoped, tag = 'output window, operand 0']
    %7 = vsyncpa [#allocation3], 0
    %8 = vsyncpa [#allocation6], 0
    %s9 = scalar_lea.sflag [#allocation6], 1
    %10 = vsyncpa %s9, 0
    %11 = vsyncpa [#allocation4], 0
    %s12 = scalar_lea.sflag [#allocation4], 1
    %13 = vsyncpa %s12, 0
    loop: start=0, step=1, limit=4
    $region2: #{tpu_custom_call.1} parent=1 // loop_pre_header
      _
    $region3: #{tpu_custom_call.1} parent=1 // loop_header
      %s15 = sphi 0, %s19
      %p16 = scmp.ge.s32.totalorder %s15, 4
      %s23 = sphi 0, %s23
      %s25 = sphi 0, %s23
      %s26 = sphi 0, %s25
      %s40 = sphi 0, %s26
      %s46 = sphi 0, %s48
      %s49 = sphi 0, %s46
      %s50 = sphi 0, %s49
      %s66 = sphi 0, %s50
      %s72 = sphi 0, %s74
      %s75 = sphi 0, %s72
      %s76 = sphi 0, %s75
      %s92 = sphi 0, %s76
    $region4: #{tpu_custom_call.1} parent=1 // loop_header_branch
      %18 = sbr.rel (%p16) target = $region8
    $region5: #{tpu_custom_call.1} parent=1 // loop_body
      %s20 = ssub.s32 %s15, 1
      %s21 = ssub.s32 %s15, 2
      %s22 = sadd.s32 %s15, 1
      %s24 = sadd.s32 %s23, 1
      %p27 = scmp.eq.s32.totalorder %s15, 1
      %p28 = scmp.ne.s32.totalorder %s23, %s25
      %p29 = scmp.eq.s32.totalorder %s15, 0
      %p30 = por %p28, %p29
      %p31 = scmp.ne.s32.totalorder %s23, %s25
      %p32 = scmp.eq.s32.totalorder %s20, 1
      %p33 = por %p31, %p32
      %p34 = scmp.ne.s32.totalorder %s25, %s26
      %p35 = scmp.eq.s32.totalorder %s20, 0
      %p36 = por %p34, %p35
      %p37 = scmp.ne.s32.totalorder %s25, %s26
      %p38 = scmp.eq.s32.totalorder %s21, 1
      %p39 = por %p37, %p38
      %p41 = scmp.ne.s32.totalorder %s26, %s40
      %p42 = scmp.eq.s32.totalorder %s21, 0
      %p43 = por %p41, %p42
      %s44 = ssub.s32 %s15, %s22
      %p45 = scmp.eq.s32.totalorder %s44, 0
      %s47 = sadd.s32 %s46, 1
      %s48 = scalar_select %p45, %s46, %s47
      %p51 = pneg %p45
      %p52 = scmp.eq.s32.totalorder %s15, 1
      %p53 = por %p51, %p52
      %p54 = scmp.ne.s32.totalorder %s46, %s49
      %p55 = scmp.eq.s32.totalorder %s15, 0
      %p56 = por %p54, %p55
      %p57 = scmp.ne.s32.totalorder %s46, %s49
      %p58 = scmp.eq.s32.totalorder %s20, 1
      %p59 = por %p57, %p58
      %p60 = scmp.ne.s32.totalorder %s49, %s50
      %p61 = scmp.eq.s32.totalorder %s20, 0
      %p62 = por %p60, %p61
      %p63 = scmp.ne.s32.totalorder %s49, %s50
      %p64 = scmp.eq.s32.totalorder %s21, 1
      %p65 = por %p63, %p64
      %p67 = scmp.ne.s32.totalorder %s50, %s66
      %p68 = scmp.eq.s32.totalorder %s21, 0
      %p69 = por %p67, %p68
      %s70 = ssub.s32 %s15, %s22
      %p71 = scmp.eq.s32.totalorder %s70, 0
      %s73 = sadd.s32 %s72, 1
      %s74 = scalar_select %p71, %s72, %s73
      %p77 = pneg %p71
      %p78 = scmp.eq.s32.totalorder %s15, 1
      %p79 = por %p77, %p78
      %p80 = scmp.ne.s32.totalorder %s72, %s75
      %p81 = scmp.eq.s32.totalorder %s15, 0
      %p82 = por %p80, %p81
      %p83 = scmp.ne.s32.totalorder %s72, %s75
      %p84 = scmp.eq.s32.totalorder %s20, 1
      %p85 = por %p83, %p84
      %p86 = scmp.ne.s32.totalorder %s75, %s76
      %p87 = scmp.eq.s32.totalorder %s20, 0
      %p88 = por %p86, %p87
      %p89 = scmp.ne.s32.totalorder %s75, %s76
      %p90 = scmp.eq.s32.totalorder %s21, 1
      %p91 = por %p89, %p90
      %p93 = scmp.ne.s32.totalorder %s76, %s92
      %p94 = scmp.eq.s32.totalorder %s21, 0
      %p95 = por %p93, %p94
      %p96 = scmp.le.s32.totalorder 1, %s15
      %p97 = scmp.lt.s32.totalorder %s15, 3
      %p98 = pnand %p96, %p97
      %p99 = pneg %p98
      // Predicated region
      $region9: #{tpu_custom_call.1} parent=5 // pred_check
        _
      $region10: #{tpu_custom_call.1} parent=5 // pred_check_branch
        %101 = sbr.rel (%p98) target = $region12
      $region11: #{tpu_custom_call.1} parent=5 // pred_region
        %s102 = ssub.s32 %s15, 1
        // Predicated region
        $region13: #{tpu_custom_call.1} parent=11 // pred_check
          %p103 = pneg %p36
        $region14: #{tpu_custom_call.1} parent=11 // pred_check_branch
          %105 = sbr.rel (%p103) target = $region16
        $region15: #{tpu_custom_call.1} parent=11 // pred_region
          %107 = vsyncadd [#allocation3], 0
          %s108 = sshll.u32 %s0, 4
          %s109 = int_to_ptr.hbm [resolvable:$true] %s108
          %s110 = sshll.u32 [#allocation2], 4
          %s111 = int_to_ptr.vmem [resolvable:$true] %s110
          %116 = dma.hbm_to_vmem [thread:$0]  %s109, 1408, %s111, [#allocation3], 128, 128, 8
        $region16: #{tpu_custom_call.1} parent=11 // pred_fallthru
          _
      $region12: #{tpu_custom_call.1} parent=5 // pred_fallthru
        _
      %p117 = scmp.lt.s32.totalorder %s15, 2
      // Predicated region
      $region17: #{tpu_custom_call.1} parent=5 // pred_check
        %p118 = pneg %p117
      $region18: #{tpu_custom_call.1} parent=5 // pred_check_branch
        %120 = sbr.rel (%p118) target = $region20
      $region19: #{tpu_custom_call.1} parent=5 // pred_region
        // Predicated region
        $region21: #{tpu_custom_call.1} parent=19 // pred_check
          %p121 = pneg %p56
        $region22: #{tpu_custom_call.1} parent=19 // pred_check_branch
          %123 = sbr.rel (%p121) target = $region24
        $region23: #{tpu_custom_call.1} parent=19 // pred_region
          %s124 = sand.u32 %s46, 1
          %s125 = scalar_lea.sflag [#allocation6], %s124
          %s126 = sand.u32 %s46, 1
          %s127 = smul.addr %s126, 176
          %s128 = scalar_lea.vmem [#allocation5], %s127
          %s129 = smul.u32 2, %s15
          %131 = vsyncadd %s125, 0
          %s132 = smul.addr %s129, 8
          %s133 = scalar_lea.hbm %s1, %s132
          %s134 = sshll.u32 %s133, 4
          %s135 = int_to_ptr.hbm [resolvable:$true] %s134
          %s136 = sshll.u32 %s128, 4
          %s137 = int_to_ptr.vmem [resolvable:$true] %s136
          %142 = dma.hbm_to_vmem [thread:$0]  %s135, 2816, %s137, %s125, 512, 256, 16
        $region24: #{tpu_custom_call.1} parent=19 // pred_fallthru
          _
      $region20: #{tpu_custom_call.1} parent=5 // pred_fallthru
        _
      %p143 = scmp.le.s32.totalorder 1, %s15
      %p144 = scmp.lt.s32.totalorder %s15, 3
      %p145 = pnand %p143, %p144
      %p146 = pneg %p145
      // Predicated region
      $region25: #{tpu_custom_call.1} parent=5 // pred_check
        _
      $region26: #{tpu_custom_call.1} parent=5 // pred_check_branch
        %148 = sbr.rel (%p145) target = $region28
      $region27: #{tpu_custom_call.1} parent=5 // pred_region
        %s149 = ssub.s32 %s15, 1
        // Predicated region
        $region29: #{tpu_custom_call.1} parent=27 // pred_check
          %p150 = pneg %p36
        $region30: #{tpu_custom_call.1} parent=27 // pred_check_branch
          %152 = sbr.rel (%p150) target = $region32
        $region31: #{tpu_custom_call.1} parent=27 // pred_region
          %154 = dma.done [#allocation3], 1408
        $region32: #{tpu_custom_call.1} parent=27 // pred_fallthru
          _
        %s155 = sand.u32 %s49, 1
        %s156 = scalar_lea.sflag [#allocation6], %s155
        %s157 = sand.u32 %s49, 1
        %s158 = smul.addr %s157, 176
        %s159 = scalar_lea.vmem [#allocation5], %s158
        // Predicated region
        $region33: #{tpu_custom_call.1} parent=27 // pred_check
          %p160 = pneg %p62
        $region34: #{tpu_custom_call.1} parent=27 // pred_check_branch
          %162 = sbr.rel (%p160) target = $region36
        $region35: #{tpu_custom_call.1} parent=27 // pred_region
          %164 = dma.done %s156, 2816
        $region36: #{tpu_custom_call.1} parent=27 // pred_fallthru
          _
        %p165 = pneg %p36
        %p166 = pneg %p33
        %s167 = sand.u32 %s49, 1
        %s168 = scalar_lea.sflag [#allocation6], %s167
        %s169 = sand.u32 %s49, 1
        %s170 = smul.addr %s169, 176
        %s171 = scalar_lea.vmem [#allocation5], %s170
        %p172 = pneg %p62
        %p173 = pneg %p59
        %p174 = pneg %p88
        %p175 = pneg %p85
        %s176 = sand.u32 %s75, 1
        %s177 = scalar_lea.sflag [#allocation4], %s176
        %s178 = sand.u32 %s75, 1
        %s179 = smul.addr %s178, 176
        %s180 = scalar_lea.vmem [#allocation7], %s179
        %s181 = smul.u32 2, %s20
        %s182 = smul.u32 2, %s20
        %v183 = vld [vmem:[#allocation2] sm:$0xff]
        %v184 = vld [vmem:[#allocation2 + $0x8] sm:$0xff]
        %v185 = vld [vmem:[#allocation2 + $0x10] sm:$0xff]
        %v186 = vld [vmem:[#allocation2 + $0x18] sm:$0xff]
        %v187 = vld [vmem:[#allocation2 + $0x20] sm:$0xff]
        %v188 = vld [vmem:[#allocation2 + $0x28] sm:$0xff]
        %v189 = vld [vmem:[#allocation2 + $0x30] sm:$0xff]
        %v190 = vld [vmem:[#allocation2 + $0x38] sm:$0xff]
        %v191 = vld [vmem:[#allocation2 + $0x40] sm:$0xff]
        %v192 = vld [vmem:[#allocation2 + $0x48] sm:$0xff]
        %v193 = vld [vmem:[#allocation2 + $0x50] sm:$0xff]
        %v194 = vld [vmem:[%s159] sm:$0xff]
        %v195 = vld [vmem:[%s159 + $0x8] sm:$0xff]
        %v196 = vld [vmem:[%s159 + $0x10] sm:$0xff]
        %v197 = vld [vmem:[%s159 + $0x18] sm:$0xff]
        %v198 = vld [vmem:[%s159 + $0x20] sm:$0xff]
        %v199 = vld [vmem:[%s159 + $0x28] sm:$0xff]
        %v200 = vld [vmem:[%s159 + $0x30] sm:$0xff]
        %v201 = vld [vmem:[%s159 + $0x38] sm:$0xff]
        %v202 = vld [vmem:[%s159 + $0x40] sm:$0xff]
        %v203 = vld [vmem:[%s159 + $0x48] sm:$0xff]
        %v204 = vld [vmem:[%s159 + $0x50] sm:$0xff]
        %v205 = vld [vmem:[%s159 + $0x58] sm:$0xff]
        %v206 = vld [vmem:[%s159 + $0x60] sm:$0xff]
        %v207 = vld [vmem:[%s159 + $0x68] sm:$0xff]
        %v208 = vld [vmem:[%s159 + $0x70] sm:$0xff]
        %v209 = vld [vmem:[%s159 + $0x78] sm:$0xff]
        %v210 = vld [vmem:[%s159 + $0x80] sm:$0xff]
        %v211 = vld [vmem:[%s159 + $0x88] sm:$0xff]
        %v212 = vld [vmem:[%s159 + $0x90] sm:$0xff]
        %v213 = vld [vmem:[%s159 + $0x98] sm:$0xff]
        %v214 = vld [vmem:[%s159 + $0xa0] sm:$0xff]
        %v215 = vld [vmem:[%s159 + $0xa8] sm:$0xff]
        %vm216 = vcmask 719872
        %v218 = vsel %vm216, %v183, 0
        %v221 = vsel %vm216, %v184, 0
        %v224 = vsel %vm216, %v185, 0
        %v227 = vsel %vm216, %v186, 0
        %v230 = vsel %vm216, %v187, 0
        %v233 = vsel %vm216, %v188, 0
        %v236 = vsel %vm216, %v189, 0
        %v239 = vsel %vm216, %v190, 0
        %v242 = vsel %vm216, %v191, 0
        %v245 = vsel %vm216, %v192, 0
        %v248 = vsel %vm216, %v193, 0
        %250 = vmatpush.msra.mxu0 0.0
        %251 = vmatpush.msra.mxu0 0.0
        %252 = vmatpush.msra.mxu0 0.0
        %253 = vmatpush.msra.mxu0 0.0
        %254 = vmatpush.msra.mxu0 0.0
        %255 = vmatpush.msra.mxu0 %v214
        %256 = vmatpush.msra.mxu0 %v212
        %257 = vmatpush.msra.mxu0 %v210
        %258 = vmatpush.msra.mxu0 %v208
        %259 = vmatpush.msra.mxu0 %v206
        %260 = vmatpush.msra.mxu0 %v204
        %261 = vmatpush.msra.mxu0 %v202
        %262 = vmatpush.msra.mxu0 %v200
        %263 = vmatpush.msra.mxu0 %v198
        %264 = vmatpush.msra.mxu0 %v196
        %265 = vmatpush.msra.mxu0 %v194
        %266 = vmatmul.f32.gmra.mxu0 %v218
        %v267 = vpop.f32.mrf.mxu0
        %v268 = vadd.f32 0.0, %v267
        %269 = vmatmul.f32.gmra.mxu0 %v221
        %v270 = vpop.f32.mrf.mxu0
        %v271 = vadd.f32 0.0, %v270
        %272 = vmatmul.f32.gmra.mxu0 %v224
        %v273 = vpop.f32.mrf.mxu0
        %v274 = vadd.f32 0.0, %v273
        %275 = vmatmul.f32.gmra.mxu0 %v227
        %v276 = vpop.f32.mrf.mxu0
        %v277 = vadd.f32 0.0, %v276
        %278 = vmatmul.f32.gmra.mxu0 %v230
        %v279 = vpop.f32.mrf.mxu0
        %v280 = vadd.f32 0.0, %v279
        %281 = vmatmul.f32.gmra.mxu0 %v233
        %v282 = vpop.f32.mrf.mxu0
        %v283 = vadd.f32 0.0, %v282
        %284 = vmatmul.f32.gmra.mxu0 %v236
        %v285 = vpop.f32.mrf.mxu0
        %v286 = vadd.f32 0.0, %v285
        %287 = vmatmul.f32.gmra.mxu0 %v239
        %v288 = vpop.f32.mrf.mxu0
        %v289 = vadd.f32 0.0, %v288
        %290 = vmatmul.f32.gmra.mxu0 %v242
        %v291 = vpop.f32.mrf.mxu0
        %v292 = vadd.f32 0.0, %v291
        %293 = vmatmul.f32.gmra.mxu0 %v245
        %v294 = vpop.f32.mrf.mxu0
        %v295 = vadd.f32 0.0, %v294
        %296 = vmatmul.f32.gmra.mxu0 %v248
        %v297 = vpop.f32.mrf.mxu0
        %v298 = vadd.f32 0.0, %v297
        %299 = vdwg.mxu0
        %300 = vmatpush.msra.mxu0 0.0
        %301 = vmatpush.msra.mxu0 0.0
        %302 = vmatpush.msra.mxu0 0.0
        %303 = vmatpush.msra.mxu0 0.0
        %304 = vmatpush.msra.mxu0 0.0
        %305 = vmatpush.msra.mxu0 %v215
        %306 = vmatpush.msra.mxu0 %v213
        %307 = vmatpush.msra.mxu0 %v211
        %308 = vmatpush.msra.mxu0 %v209
        %309 = vmatpush.msra.mxu0 %v207
        %310 = vmatpush.msra.mxu0 %v205
        %311 = vmatpush.msra.mxu0 %v203
        %312 = vmatpush.msra.mxu0 %v201
        %313 = vmatpush.msra.mxu0 %v199
        %314 = vmatpush.msra.mxu0 %v197
        %315 = vmatpush.msra.mxu0 %v195
        %316 = vmatmul.f32.gmra.mxu0 %v218
        %v317 = vpop.f32.mrf.mxu0
        %v318 = vadd.f32 0.0, %v317
        %319 = vmatmul.f32.gmra.mxu0 %v221
        %v320 = vpop.f32.mrf.mxu0
        %v321 = vadd.f32 0.0, %v320
        %322 = vmatmul.f32.gmra.mxu0 %v224
        %v323 = vpop.f32.mrf.mxu0
        %v324 = vadd.f32 0.0, %v323
        %325 = vmatmul.f32.gmra.mxu0 %v227
        %v326 = vpop.f32.mrf.mxu0
        %v327 = vadd.f32 0.0, %v326
        %328 = vmatmul.f32.gmra.mxu0 %v230
        %v329 = vpop.f32.mrf.mxu0
        %v330 = vadd.f32 0.0, %v329
        %331 = vmatmul.f32.gmra.mxu0 %v233
        %v332 = vpop.f32.mrf.mxu0
        %v333 = vadd.f32 0.0, %v332
        %334 = vmatmul.f32.gmra.mxu0 %v236
        %v335 = vpop.f32.mrf.mxu0
        %v336 = vadd.f32 0.0, %v335
        %337 = vmatmul.f32.gmra.mxu0 %v239
        %v338 = vpop.f32.mrf.mxu0
        %v339 = vadd.f32 0.0, %v338
        %340 = vmatmul.f32.gmra.mxu0 %v242
        %v341 = vpop.f32.mrf.mxu0
        %v342 = vadd.f32 0.0, %v341
        %343 = vmatmul.f32.gmra.mxu0 %v245
        %v344 = vpop.f32.mrf.mxu0
        %v345 = vadd.f32 0.0, %v344
        %346 = vmatmul.f32.gmra.mxu0 %v248
        %v347 = vpop.f32.mrf.mxu0
        %v348 = vadd.f32 0.0, %v347
        %349 = vdwg.mxu0
        %350 = vst [vmem:[%s180] sm:$0xff] %v268
        %351 = vst [vmem:[%s180 + $0x8] sm:$0xff] %v318
        %352 = vst [vmem:[%s180 + $0x10] sm:$0xff] %v271
        %353 = vst [vmem:[%s180 + $0x18] sm:$0xff] %v321
        %354 = vst [vmem:[%s180 + $0x20] sm:$0xff] %v274
        %355 = vst [vmem:[%s180 + $0x28] sm:$0xff] %v324
        %356 = vst [vmem:[%s180 + $0x30] sm:$0xff] %v277
        %357 = vst [vmem:[%s180 + $0x38] sm:$0xff] %v327
        %358 = vst [vmem:[%s180 + $0x40] sm:$0xff] %v280
        %359 = vst [vmem:[%s180 + $0x48] sm:$0xff] %v330
        %360 = vst [vmem:[%s180 + $0x50] sm:$0xff] %v283
        %361 = vst [vmem:[%s180 + $0x58] sm:$0xff] %v333
        %362 = vst [vmem:[%s180 + $0x60] sm:$0xff] %v286
        %363 = vst [vmem:[%s180 + $0x68] sm:$0xff] %v336
        %364 = vst [vmem:[%s180 + $0x70] sm:$0xff] %v289
        %365 = vst [vmem:[%s180 + $0x78] sm:$0xff] %v339
        %366 = vst [vmem:[%s180 + $0x80] sm:$0xff] %v292
        %367 = vst [vmem:[%s180 + $0x88] sm:$0xff] %v342
        %368 = vst [vmem:[%s180 + $0x90] sm:$0xff] %v295
        %369 = vst [vmem:[%s180 + $0x98] sm:$0xff] %v345
        %370 = vst [vmem:[%s180 + $0xa0] sm:$0xff] %v298
        %371 = vst [vmem:[%s180 + $0xa8] sm:$0xff] %v348
        %s372 = sand.u32 %s75, 1
        %s373 = scalar_lea.sflag [#allocation4], %s372
        %s374 = sand.u32 %s75, 1
        %s375 = smul.addr %s374, 176
        %s376 = scalar_lea.vmem [#allocation7], %s375
        // Predicated region
        $region37: #{tpu_custom_call.1} parent=27 // pred_check
          %p377 = pneg %p85
        $region38: #{tpu_custom_call.1} parent=27 // pred_check_branch
          %379 = sbr.rel (%p377) target = $region40
        $region39: #{tpu_custom_call.1} parent=27 // pred_region
          %s380 = smul.u32 2, %s20
          %382 = vsyncadd %s373, 0
          %s383 = smul.addr %s380, 8
          %s384 = scalar_lea.hbm %s2, %s383
          %s385 = sshll.u32 %s376, 4
          %s386 = int_to_ptr.vmem [resolvable:$true] %s385
          %s387 = sshll.u32 %s384, 4
          %s388 = int_to_ptr.hbm [resolvable:$true] %s387
          %393 = dma.vmem_to_hbm [thread:$0]  %s386, 2816, %s388, %s373, 256, 512, 16
        $region40: #{tpu_custom_call.1} parent=27 // pred_fallthru
          _
      $region28: #{tpu_custom_call.1} parent=5 // pred_fallthru
        _
      %p394 = scmp.le.s32.totalorder 2, %s15
      // Predicated region
      $region41: #{tpu_custom_call.1} parent=5 // pred_check
        %p395 = pneg %p394
      $region42: #{tpu_custom_call.1} parent=5 // pred_check_branch
        %397 = sbr.rel (%p395) target = $region44
      $region43: #{tpu_custom_call.1} parent=5 // pred_region
        %s398 = ssub.s32 %s15, 2
        // Predicated region
        $region45: #{tpu_custom_call.1} parent=43 // pred_check
          %p399 = pneg %p91
        $region46: #{tpu_custom_call.1} parent=43 // pred_check_branch
          %401 = sbr.rel (%p399) target = $region48
        $region47: #{tpu_custom_call.1} parent=43 // pred_region
          %s402 = sand.u32 %s76, 1
          %s403 = scalar_lea.sflag [#allocation4], %s402
          %s404 = sand.u32 %s76, 1
          %s405 = smul.addr %s404, 176
          %s406 = scalar_lea.vmem [#allocation7], %s405
          %408 = dma.done %s403, 2816
        $region48: #{tpu_custom_call.1} parent=43 // pred_fallthru
          _
      $region44: #{tpu_custom_call.1} parent=5 // pred_fallthru
        _
    $region6: #{tpu_custom_call.1} parent=1 // loop_footer
      %s19 = sadd.s32 1, %s15
    $region7: #{tpu_custom_call.1} parent=1 // loop_footer_branch
      %14 = sbr.rel target = $region3
    $region8: #{tpu_custom_call.1} parent=1 // loop_exit
      _
    %409 = vsyncpa [#allocation3], 1
    %s410 = scalar_lea.sflag [#allocation3], 1
    %411 = vsyncpa %s410, 1
    %412 = vsyncpa [#allocation6], 1
    %s413 = scalar_lea.sflag [#allocation6], 1
    %414 = vsyncpa %s413, 1
    %415 = vsyncpa [#allocation4], 1
    %s416 = scalar_lea.sflag [#allocation4], 1
    %417 = vsyncpa %s416, 1

</llo_original>
